<compile_context>
chip_gen: v7x
topology: tpu7x:2x2x1
jax: 0.10.0
libtpu: 0.0.40
codegen_flags: <defaults>
</compile_context>

<pallas_src>
import math

import jax
import jax.numpy as jnp
from jax.experimental import pallas as pl
from jax.experimental.pallas import tpu as pltpu


_LANE = 128
# ~8 MiB blocks => 4 x block (in+out, double-buffered) = ~32 MiB pipeline
# footprint, safely under the explicit vmem_limit_bytes on every generation.
_DEFAULT_TARGET_BLOCK_BYTES = 8 << 20


def _copy_kernel(x_ref, o_ref):
    # Pure streaming copy of one lane-dense, fully contiguous block.
    o_ref[...] = x_ref[...]


def _largest_divisor(n: int, cap: int, multiple_of: int = 1) -> int:
    """Largest divisor of `n` that is <= cap and a multiple of `multiple_of` (0 if none)."""
    best = 0
    d = 1
    while d * d <= n:
        if n % d == 0:
            for q in (d, n // d):
                if q <= cap and q % multiple_of == 0 and q > best:
                    best = q
        d += 1
    return best


def _vmem_limit_bytes() -> int:
    """Per-generation scoped-VMEM budget: 64 MiB on v5e/v6e, 48 MiB on v7x."""
    phys = None
    try:
        info = pltpu.get_tpu_info()
        phys = getattr(info, "vmem_capacity_bytes", None)
    except Exception:
        phys = None
    if not phys:
        phys = 64 << 20  # conservative: v7x per-TC physical VMEM
    return max(32 << 20, min(64 << 20, int(phys) - (16 << 20)))


def _choose_layout(n_elems: int, itemsize: int, target_block_bytes: int):
    """Shape-independent lane-dense 2D view (n_rows, L) + (row_tile, L) block.

    Full-width columns => one block is a single contiguous HBM run.
    Returns (n_rows, n_cols, row_tile, col_tile) or None if no legal tiling.
    """
    if n_elems < _LANE or n_elems % _LANE != 0:
        return None
    # dtype-aware sublane unit: 8 for f32, 16 for bf16, 32 for int8/fp8.
    sub = max(8, (8 * 4) // itemsize)
    target_elems = max(sub * _LANE, target_block_bytes // itemsize)

    m = n_elems // _LANE
    # Cap the lane width so a full sublane-unit of rows still fits the block.
    k_cap = max(1, (target_elems // sub) // _LANE)
    k = _largest_divisor(m, k_cap, multiple_of=1)
    n_cols = _LANE * k
    n_rows = n_elems // n_cols

    row_cap = max(sub, target_elems // n_cols)
    if n_rows <= row_cap:
        row_tile = n_rows  # full-extent block dim: always legal
    else:
        row_tile = _largest_divisor(n_rows, row_cap, multiple_of=sub)
        if row_tile == 0:
            row_tile = _largest_divisor(n_rows, row_cap, multiple_of=8)
        if row_tile == 0:
            return None
    return n_rows, n_cols, row_tile, n_cols


def _flatten_out_shape(shape, start_dim: int, end_dim: int):
    ndim = len(shape)
    end_dim = end_dim if end_dim >= 0 else ndim + end_dim
    shape_left = shape[:start_dim]
    shape_right = shape[end_dim + 1:]
    shape_middle = int(math.prod(shape[start_dim:end_dim + 1]))
    return shape_left + (shape_middle,) + shape_right


def pallas_flatten(x: jax.Array, start_dim: int = 1, end_dim: int = -1,
                   *, use_kernel: bool = False,
                   target_block_bytes: int = _DEFAULT_TARGET_BLOCK_BYTES) -> jax.Array:
    """Flatten dims [start_dim, end_dim] of `x` (torch.flatten semantics).

    Default (use_kernel=False) is the production path: a free metadata reshape.
    use_kernel=True runs the lane-dense streaming copy kernel for benchmarking.
    """
    out_shape = _flatten_out_shape(x.shape, start_dim, end_dim)

    # Production / degenerate path: metadata-only reshape, zero HBM traffic.
    if not use_kernel or x.ndim == 0 or x.size == 0:
        return x.reshape(out_shape)

    itemsize = jnp.dtype(x.dtype).itemsize
    n_elems = int(x.size)
    layout = _choose_layout(n_elems, itemsize, target_block_bytes)
    if layout is None:
        # Documented fallback: element count can't be tiled to (8,128)-legal,
        # multi-MiB blocks (e.g. size not a multiple of 128). Reshape is free.
        return x.reshape(out_shape)

    n_rows, n_cols, row_tile, col_tile = layout
    grid = (n_rows // row_tile, n_cols // col_tile)  # col grid is 1 (full width)
    x2 = x.reshape((n_rows, n_cols))  # metadata-only view of the flat buffer

    flat2 = pl.pallas_call(
        _copy_kernel,
        out_shape=jax.ShapeDtypeStruct((n_rows, n_cols), x.dtype),
        grid_spec=pltpu.PrefetchScalarGridSpec(
            num_scalar_prefetch=0,
            grid=grid,
            in_specs=[pl.BlockSpec((row_tile, col_tile), lambda i, j: (i, j))],
            out_specs=pl.BlockSpec((row_tile, col_tile), lambda i, j: (i, j)),
        ),
        compiler_params=pltpu.CompilerParams(
            # Independent copy tiles: v7x's 2 TensorCores split the row grid;
            # measured-neutral on single-core v5e/v6e.
            dimension_semantics=("parallel", "parallel"),
            vmem_limit_bytes=_vmem_limit_bytes(),
        ),
        cost_estimate=pl.CostEstimate(
            flops=0, transcendentals=0,
            bytes_accessed=2 * n_elems * itemsize),
    )(x2)

    # Metadata-only reshape back to the torch-equivalent output shape.
    return flat2.reshape(out_shape)


if __name__ == "__main__":
    key = jax.random.PRNGKey(0)

    # --- Primary test: NCHW input, same small shape a CNN flatten would see. ---
    x = jax.random.normal(key, (2, 4, 16, 16), dtype=jnp.float32)
    out = jax.block_until_ready(pallas_flatten(x, start_dim=1, end_dim=-1, use_kernel=True))
    ref = x.reshape((2, 4 * 16 * 16))
    assert out.shape == (2, 1024), out.shape
    assert out.dtype == x.dtype
    assert bool(jnp.array_equal(out, ref))

    # --- Production (default) path: pure metadata reshape. ---
    out2 = jax.block_until_ready(pallas_flatten(x))
    assert bool(jnp.array_equal(out2, ref))

    # --- start_dim=0 (flatten everything): shape-decoupled tiling handles it. ---
    out3 = jax.block_until_ready(pallas_flatten(x, start_dim=0, end_dim=-1, use_kernel=True))
    assert out3.shape == (2 * 4 * 16 * 16,)
    assert bool(jnp.array_equal(out3, x.reshape(-1)))

    # --- Multi-block grid: small block target forces a (8, 1) grid of (8, 512) blocks. ---
    key, k1, k2 = jax.random.split(key, 3)
    y = jax.random.normal(k1, (4, 8, 32, 32), dtype=jnp.float32)
    out4 = jax.block_until_ready(
        pallas_flatten(y, start_dim=1, end_dim=-1, use_kernel=True,
                       target_block_bytes=16 << 10))
    assert out4.shape == (4, 8 * 32 * 32)
    assert bool(jnp.array_equal(out4, y.reshape((4, -1))))

    # --- dtype-aware sublane tiling: bf16 uses 16-row tiles. ---
    z = jax.random.normal(k2, (4, 8, 32, 32), dtype=jnp.float32).astype(jnp.bfloat16)
    out5 = jax.block_until_ready(
        pallas_flatten(z, start_dim=2, end_dim=3, use_kernel=True,
                       target_block_bytes=16 << 10))
    assert out5.shape == (4, 8, 32 * 32)
    assert bool(jnp.array_equal(out5, z.reshape((4, 8, -1))))

    print("KERNEL_OK")
</pallas_src>

<mosaic_0001>
module attributes {stable_mosaic.version = 11 : i64} {
  func.func @_copy_kernel(%arg0: i32, %arg1: i32, %arg2: memref<1x2048xf32, #tpu.memory_space<vmem>>, %arg3: memref<1x2048xf32, #tpu.memory_space<vmem>>) attributes {dimension_semantics = [#tpu.dimension_semantics<parallel>, #tpu.dimension_semantics<parallel>], iteration_bounds = array<i64: 1, 1>, scalar_prefetch = 0 : i64, scratch_operands = 0 : i64, tpu.core_type = #tpu.core_type<tc>, window_params = [{transform_indices = @transform_0, window_bounds = array<i64: 1, 2048>}, {transform_indices = @transform_1, window_bounds = array<i64: 1, 2048>}]} {
    %c0 = arith.constant 0 : index
    %c0_0 = arith.constant 0 : index
    %0 = vector.load %arg2[%c0, %c0_0] : memref<1x2048xf32, #tpu.memory_space<vmem>>, vector<1x2048xf32>
    %c0_1 = arith.constant 0 : index
    %c0_2 = arith.constant 0 : index
    %1 = vector.load %arg3[%c0_1, %c0_2] : memref<1x2048xf32, #tpu.memory_space<vmem>>, vector<1x2048xf32>
    tpu.vector_store %arg3[%c0_1, %c0_2], %0 {strides = array<i32>} : memref<1x2048xf32, #tpu.memory_space<vmem>>, vector<1x2048xf32>,
    return
  }
  func.func @transform_0(%arg0: i32, %arg1: i32) -> (i32, i32) {
    %c0_i32 = arith.constant 0 : i32
    return %arg0, %arg1 : i32, i32
  }
  func.func @transform_1(%arg0: i32, %arg1: i32) -> (i32, i32) {
    %c0_i32 = arith.constant 0 : i32
    return %arg0, %arg1 : i32, i32
  }
}

</mosaic_0001>

<llo_original>
// kernel: tpu_custom_call.1
$region0: #{tpu_custom_call.1}
  #allocation0 [shape = 'u32[]', space=smem, size = 0x4, offset = 0x4, fixed_abs, tag = 'smem constant byte address 0x4 - core index']
  #allocation1 [shape = 'u32[144,128]{1,0:T(1,128)}', space=vmem, size = 0x12000, scoped, tag = 'internal scratch']
  %s0 = inlined_call_operand.hbm [shape: f32[1,2048], index: 0, kind: input, shape index: {}]
  %s1 = inlined_call_operand.hbm [shape: f32[1,2048], index: 1, kind: output, shape index: {}]
  %s2 = sld [smem:[#allocation0]]
  $region18: #{tpu_custom_call.1} parent=0
    _
  %s4 = ssub.s32 1, %s2
  %s5 = scalar_select 0, %s4, %s2
  $region1: #{tpu_custom_call.1} parent=0
    #allocation2 [shape = 'u8[8192]{0}', space=vmem, size = 0x2000, scoped, tag = 'input window, operand 0, single buffered']
    #allocation3 [shape = 's32[1]{0}', space=sflag, size = 0x4, scoped, tag = 'scoped memory for tpu_custom_call.1']
    #allocation4 [shape = 's32[1]{0}', space=sflag, size = 0x4, scoped, tag = 'scoped memory for tpu_custom_call.1']
    #allocation5 [shape = 'u8[8192]{0}', space=vmem, size = 0x2000, scoped, tag = 'output window, operand 0, single buffered']
    %6 = vsyncpa [#allocation3], 0
    %7 = vsyncpa [#allocation4], 0
    // Predicated region
    $region2: #{tpu_custom_call.1} parent=1 // pred_check
      _
    $region3: #{tpu_custom_call.1} parent=1 // pred_check_branch
      %9 = sbr.rel (0) target = $region5
    $region4: #{tpu_custom_call.1} parent=1 // pred_region
      %s11 = ssub.s32 256, 256
      %12 = vsyncadd [#allocation3], %s11
      %s14 = sshll.u32 [#allocation2], 4
      %s15 = int_to_ptr.vmem [resolvable:$true] %s14
      %17 = dma.hbm_to_vmem [thread:$0]  %s0, 256, %s15, [#allocation3]
    $region5: #{tpu_custom_call.1} parent=1 // pred_fallthru
      _
    // Predicated region
    $region6: #{tpu_custom_call.1} parent=1 // pred_check
      _
    $region7: #{tpu_custom_call.1} parent=1 // pred_check_branch
      %19 = sbr.rel (0) target = $region9
    $region8: #{tpu_custom_call.1} parent=1 // pred_region
      %20 = dma.done [#allocation3], 256
    $region9: #{tpu_custom_call.1} parent=1 // pred_fallthru
      _
    %v21 = vld [vmem:[#allocation2] sm:$0xff]
    %v22 = vld [vmem:[#allocation2 + $0x8] sm:$0xff]
    %23 = vst [vmem:[#allocation5] sm:$0xff] %v21
    %24 = vst [vmem:[#allocation5 + $0x8] sm:$0xff] %v22
    // Predicated region
    $region10: #{tpu_custom_call.1} parent=1 // pred_check
      _
    $region11: #{tpu_custom_call.1} parent=1 // pred_check_branch
      %26 = sbr.rel (0) target = $region13
    $region12: #{tpu_custom_call.1} parent=1 // pred_region
      %s28 = ssub.s32 256, 256
      %29 = vsyncadd [#allocation4], %s28
      %s31 = sshll.u32 [#allocation5], 4
      %s32 = int_to_ptr.vmem [resolvable:$true] %s31
      %34 = dma.vmem_to_hbm [thread:$0]  %s32, 256, %s1, [#allocation4]
    $region13: #{tpu_custom_call.1} parent=1 // pred_fallthru
      _
    // Predicated region
    $region14: #{tpu_custom_call.1} parent=1 // pred_check
      _
    $region15: #{tpu_custom_call.1} parent=1 // pred_check_branch
      %36 = sbr.rel (0) target = $region17
    $region16: #{tpu_custom_call.1} parent=1 // pred_region
      %37 = dma.done [#allocation4], 256
    $region17: #{tpu_custom_call.1} parent=1 // pred_fallthru
      _
    %38 = vsyncpa [#allocation3], 1
    %39 = vsyncpa [#allocation4], 1

</llo_original>
